<compile_context>
chip_gen: v5e
topology: v5e:2x2
jax: 0.10.0
libtpu: 0.0.40
codegen_flags: <defaults>
</compile_context>

<pallas_src>
import functools
import math

import jax
import jax.numpy as jnp
from jax import lax
from jax.experimental import pallas as pl
from jax.experimental.pallas import tpu as pltpu


# ---------------------------------------------------------------------------
# PE table (equivalent of the torch register_buffer built in __init__).
# ---------------------------------------------------------------------------
def make_positional_encoding(d_model, max_len=5000, dtype=jnp.float32):
    """pe[pos, 2i] = sin(pos * w_i), pe[pos, 2i+1] = cos(pos * w_i)."""
    position = jnp.arange(max_len, dtype=jnp.float32)[:, None]            # (L, 1)
    div_term = jnp.exp(
        jnp.arange(0, d_model, 2, dtype=jnp.float32) * (-math.log(10000.0) / d_model)
    )                                                                     # (D/2,)
    ang = position * div_term                                             # (L, D/2)
    pe = jnp.zeros((max_len, d_model), jnp.float32)
    pe = pe.at[:, 0::2].set(jnp.sin(ang))
    pe = pe.at[:, 1::2].set(jnp.cos(ang))
    return pe.astype(dtype)


# ---------------------------------------------------------------------------
# Kernel
# ---------------------------------------------------------------------------
def _hash_u32(x):
    """murmur3-style finalizer: stateless per-element hash (VPU only)."""
    x = x * jnp.uint32(0x9E3779B1)
    x = x ^ jnp.right_shift(x, jnp.uint32(16))
    x = x * jnp.uint32(0x85EBCA6B)
    x = x ^ jnp.right_shift(x, jnp.uint32(13))
    x = x * jnp.uint32(0xC2B2AE35)
    x = x ^ jnp.right_shift(x, jnp.uint32(16))
    return x


def _pos_enc_kernel(seed_ref, x_ref, pe_ref, out_ref, *,
                    dropout_p, train, seq_len, seq_tile):
    x = x_ref[...]                         # (1, TS, D)
    pe = pe_ref[...]                       # (TS, D) — broadcast over batch
    y = x + pe[None, :, :]

    if train and dropout_p > 0.0:
        b = pl.program_id(0)
        st = pl.program_id(1)
        d_model = y.shape[-1]
        # Global element counter, unique across the whole (B, S, D) output.
        row0 = b * seq_len + st * seq_tile
        row = row0 + lax.broadcasted_iota(jnp.int32, y.shape, 1)
        col = lax.broadcasted_iota(jnp.int32, y.shape, 2)
        ctr = (row * d_model + col).astype(jnp.uint32)
        bits = _hash_u32(ctr ^ seed_ref[0].astype(jnp.uint32))
        # 24-bit uniform in [0, 1)
        u = jnp.right_shift(bits, jnp.uint32(8)).astype(jnp.float32) * (
            1.0 / float(1 << 24))
        # Inverted dropout with the scale folded into the mask.
        keep_scale = jnp.where(u >= dropout_p, 1.0 / (1.0 - dropout_p), 0.0)
        y = y * keep_scale.astype(y.dtype)

    out_ref[...] = y


# ---------------------------------------------------------------------------
# Wrapper
# ---------------------------------------------------------------------------
def _seq_tile(seq_len):
    """Largest power-of-two tile (multiple of 8, <=512) dividing seq_len."""
    for ts in (512, 256, 128, 64, 32, 16, 8):
        if seq_len % ts == 0:
            return ts
    return seq_len


def positional_encoding_forward(x, pe, *, dropout_p=0.1, mode="train", seed=0):
    """Pallas forward pass matching PositionalEncoding.forward(x)."""
    B, S, D = x.shape
    assert pe.shape[1] == D and pe.shape[0] >= S, "PE table too short / wrong width"
    TS = _seq_tile(S)

    if TS % 8 == 0:
        # Index the full PE table directly — no per-call slice / HBM copy.
        pe_in = pe
        pe_spec = pl.BlockSpec((TS, D), lambda b, s, seed_ref: (s, 0))
    else:
        # S not a multiple of 8: fall back to a full-extent (S, D) PE block.
        pe_in = pe[:S]
        pe_spec = pl.BlockSpec((S, D), lambda b, s, seed_ref: (0, 0))

    kernel = functools.partial(
        _pos_enc_kernel,
        dropout_p=float(dropout_p),
        train=(mode == "train"),
        seq_len=S,
        seq_tile=TS,
    )

    seed_arr = jnp.asarray([seed], dtype=jnp.int32)

    return pl.pallas_call(
        kernel,
        out_shape=jax.ShapeDtypeStruct((B, S, D), x.dtype),
        grid_spec=pltpu.PrefetchScalarGridSpec(
            num_scalar_prefetch=1,
            grid=(B, S // TS),
            in_specs=[
                pl.BlockSpec((1, TS, D), lambda b, s, seed_ref: (b, s, 0)),  # x
                pe_spec,                                                     # pe
            ],
            out_specs=pl.BlockSpec((1, TS, D), lambda b, s, seed_ref: (b, s, 0)),
        ),
        compiler_params=pltpu.CompilerParams(
            dimension_semantics=("parallel", "parallel"),
            vmem_limit_bytes=16 * 1024 * 1024,
        ),
    )(seed_arr, x, pe_in)


# ---------------------------------------------------------------------------
# Self-test
# ---------------------------------------------------------------------------
if __name__ == "__main__":
    B, S, D = 2, 8, 32          # batch=2, seq=8, d_model=32
    MAX_LEN = 64
    P = 0.1

    key = jax.random.PRNGKey(0)
    x = jax.random.normal(key, (B, S, D), jnp.float32)
    pe = make_positional_encoding(D, max_len=MAX_LEN)

    # Eval mode (deterministic): must equal x + pe[:S] exactly.
    out_eval = jax.block_until_ready(
        positional_encoding_forward(x, pe, dropout_p=P, mode="eval"))
    ref = x + pe[:S][None, :, :]
    assert out_eval.shape == (B, S, D)
    assert jnp.allclose(out_eval, ref, atol=1e-6, rtol=1e-6), "eval mismatch"

    # Train mode: every element is either dropped (0) or kept and scaled by 1/(1-p).
    out_train = jax.block_until_ready(
        positional_encoding_forward(x, pe, dropout_p=P, mode="train", seed=1234))
    assert out_train.shape == (B, S, D)
    assert bool(jnp.all(jnp.isfinite(out_train)))
    scaled = ref / (1.0 - P)
    is_drop = jnp.isclose(out_train, 0.0, atol=1e-6)
    is_keep = jnp.isclose(out_train, scaled, atol=1e-5, rtol=1e-5)
    assert bool(jnp.all(is_drop | is_keep)), "train-mode dropout semantics violated"

    print("KERNEL_OK")
</pallas_src>

<mosaic_0001>
module attributes {stable_mosaic.version = 11 : i64} {
  func.func @_pos_enc_kernel(%arg0: i32, %arg1: i32, %arg2: memref<1xi32, #tpu.memory_space<smem>>, %arg3: memref<1x8x32xf32, #tpu.memory_space<vmem>>, %arg4: memref<8x32xf32, #tpu.memory_space<vmem>>, %arg5: memref<1x8x32xf32, #tpu.memory_space<vmem>>) attributes {dimension_semantics = [#tpu.dimension_semantics<parallel>, #tpu.dimension_semantics<parallel>], iteration_bounds = array<i64: 2, 1>, scalar_prefetch = 1 : i64, scratch_operands = 0 : i64, tpu.core_type = #tpu.core_type<tc>, window_params = [{transform_indices = @transform_0, window_bounds = array<i64: 1, 8, 32>}, {transform_indices = @transform_1, window_bounds = array<i64: 8, 32>}, {transform_indices = @transform_2, window_bounds = array<i64: 1, 8, 32>}]} {
    %c0 = arith.constant 0 : index
    %c0_0 = arith.constant 0 : index
    %c0_1 = arith.constant 0 : index
    %0 = vector.load %arg3[%c0, %c0_0, %c0_1] : memref<1x8x32xf32, #tpu.memory_space<vmem>>, vector<1x8x32xf32>
    %c0_2 = arith.constant 0 : index
    %c0_3 = arith.constant 0 : index
    %1 = vector.load %arg4[%c0_2, %c0_3] : memref<8x32xf32, #tpu.memory_space<vmem>>, vector<8x32xf32>
    %2 = vector.shape_cast %1 : vector<8x32xf32> to vector<1x8x32xf32>
    %3 = arith.addf %0, %2 : vector<1x8x32xf32>
    %c0_4 = arith.constant 0 : index
    %c0_5 = arith.constant 0 : index
    %c0_6 = arith.constant 0 : index
    %4 = vector.load %arg5[%c0_4, %c0_5, %c0_6] : memref<1x8x32xf32, #tpu.memory_space<vmem>>, vector<1x8x32xf32>
    tpu.vector_store %arg5[%c0_4, %c0_5, %c0_6], %3 {strides = array<i32>} : memref<1x8x32xf32, #tpu.memory_space<vmem>>, vector<1x8x32xf32>,
    return
  }
  func.func @transform_0(%arg0: i32, %arg1: i32, %arg2: memref<1xi32, #tpu.memory_space<smem>>) -> (i32, i32, i32) {
    %c0_i32 = arith.constant 0 : i32
    %c0_i32_0 = arith.constant 0 : i32
    return %arg0, %arg1, %c0_i32 : i32, i32, i32
  }
  func.func @transform_1(%arg0: i32, %arg1: i32, %arg2: memref<1xi32, #tpu.memory_space<smem>>) -> (i32, i32) {
    %c0_i32 = arith.constant 0 : i32
    %c0_i32_0 = arith.constant 0 : i32
    return %arg1, %c0_i32 : i32, i32
  }
  func.func @transform_2(%arg0: i32, %arg1: i32, %arg2: memref<1xi32, #tpu.memory_space<smem>>) -> (i32, i32, i32) {
    %c0_i32 = arith.constant 0 : i32
    %c0_i32_0 = arith.constant 0 : i32
    return %arg0, %arg1, %c0_i32 : i32, i32, i32
  }
}

</mosaic_0001>

<llo_original>
// kernel: tpu_custom_call.1
$region0: #{tpu_custom_call.1}
  #allocation0 [shape = 'u32[]', space=smem, size = 0x4, offset = 0x4, fixed_abs, tag = 'smem constant byte address 0x4 - core index']
  #allocation1 [shape = 'u32[72,128]{1,0:T(1,128)}', space=vmem, size = 0x9000, scoped, tag = 'internal scratch']
  #allocation2 [shape = 's32[1]{0}', space=sflag, size = 0x4, scoped, tag = 'scoped memory for tpu_custom_call.1']
  #allocation3 [shape = 's32[1]{0:T(128)S(6)}', space=smem, size = 0x200, scoped, tag = 'prefetched SMEM operand 0']
  %s0 = inlined_call_operand.<no memory space> [shape: s32[1], index: 0, kind: input, shape index: {}]
  %s1 = inlined_call_operand.vmem [shape: f32[2,8,32], index: 1, kind: input, shape index: {}]
  %s2 = inlined_call_operand.vmem [shape: f32[64,32], index: 2, kind: input, shape index: {}]
  %s3 = inlined_call_operand.hbm [shape: f32[2,8,32], index: 3, kind: output, shape index: {}]
  %s4 = sld [smem:[#allocation0]]
  $region41: #{tpu_custom_call.1} parent=0
    _
  %s6 = ssub.s32 1, %s4
  %s7 = scalar_select 0, %s6, %s4
  %8 = sst [smem:[#allocation3]] %s0
  $region1: #{tpu_custom_call.1} parent=0
    #allocation4 [shape = 'u8[8192]{0}', space=vmem, size = 0x2000, scoped, tag = 'output window, operand 0']
    #allocation5 [shape = 's32[2]{0}', space=sflag, size = 0x8, scoped, tag = 'scoped memory for tpu_custom_call.1']
    %9 = vsyncpa [#allocation5], 0
    %s10 = scalar_lea.sflag [#allocation5], 1
    %11 = vsyncpa %s10, 0
    loop: start=0, step=1, limit=4
    $region2: #{tpu_custom_call.1} parent=1 // loop_pre_header
      _
    $region3: #{tpu_custom_call.1} parent=1 // loop_header
      %s13 = sphi 0, %s17
      %p14 = scmp.ge.s32.totalorder %s13, 4
      %s20 = sphi 0, %s32
      %s21 = sphi 0, %s28
      %s22 = sphi 0, %s20
      %s23 = sphi 0, %s21
      %s24 = sphi 0, %s22
      %s25 = sphi 0, %s23
      %s37 = sphi 0, %s39
      %s40 = sphi 0, %s37
      %s41 = sphi 0, %s40
      %s57 = sphi 0, %s41
      %s63 = sphi 0, %s65
      %s66 = sphi 0, %s63
      %s67 = sphi 0, %s66
      %s83 = sphi 0, %s67
      %s91 = sphi 0, %s93
      %s94 = sphi 0, %s91
      %s95 = sphi 0, %s94
      %s111 = sphi 0, %s95
    $region4: #{tpu_custom_call.1} parent=1 // loop_header_branch
      %16 = sbr.rel (%p14) target = $region8
    $region5: #{tpu_custom_call.1} parent=1 // loop_body
      %s18 = ssub.s32 %s13, 1
      %s19 = ssub.s32 %s13, 2
      %s26 = sadd.s32 1, %s21
      %p27 = scmp.ge.s32.totalorder %s26, 1
      %s28 = scalar_select %p27, 0, %s26
      %s29 = sadd.s32 1, %s20
      %s30 = scalar_select %p27, %s29, %s20
      %p31 = scmp.ge.s32.totalorder %s30, 2
      %s32 = scalar_select %p31, 0, %s30
      %s33 = ssub.s32 %s20, %s32
      %s34 = ssub.s32 %s21, %s28
      %s35 = sor.u32 %s33, %s34
      %p36 = scmp.eq.s32.totalorder %s35, 0
      %s38 = sadd.s32 %s37, 1
      %s39 = scalar_select %p36, %s37, %s38
      %p42 = pneg %p36
      %p43 = scmp.eq.s32.totalorder %s13, 1
      %p44 = por %p42, %p43
      %p45 = scmp.ne.s32.totalorder %s37, %s40
      %p46 = scmp.eq.s32.totalorder %s13, 0
      %p47 = por %p45, %p46
      %p48 = scmp.ne.s32.totalorder %s37, %s40
      %p49 = scmp.eq.s32.totalorder %s18, 1
      %p50 = por %p48, %p49
      %p51 = scmp.ne.s32.totalorder %s40, %s41
      %p52 = scmp.eq.s32.totalorder %s18, 0
      %p53 = por %p51, %p52
      %p54 = scmp.ne.s32.totalorder %s40, %s41
      %p55 = scmp.eq.s32.totalorder %s19, 1
      %p56 = por %p54, %p55
      %p58 = scmp.ne.s32.totalorder %s41, %s57
      %p59 = scmp.eq.s32.totalorder %s19, 0
      %p60 = por %p58, %p59
      %s61 = ssub.s32 %s21, %s28
      %p62 = scmp.eq.s32.totalorder %s61, 0
      %s64 = sadd.s32 %s63, 1
      %s65 = scalar_select %p62, %s63, %s64
      %p68 = pneg %p62
      %p69 = scmp.eq.s32.totalorder %s13, 1
      %p70 = por %p68, %p69
      %p71 = scmp.ne.s32.totalorder %s63, %s66
      %p72 = scmp.eq.s32.totalorder %s13, 0
      %p73 = por %p71, %p72
      %p74 = scmp.ne.s32.totalorder %s63, %s66
      %p75 = scmp.eq.s32.totalorder %s18, 1
      %p76 = por %p74, %p75
      %p77 = scmp.ne.s32.totalorder %s66, %s67
      %p78 = scmp.eq.s32.totalorder %s18, 0
      %p79 = por %p77, %p78
      %p80 = scmp.ne.s32.totalorder %s66, %s67
      %p81 = scmp.eq.s32.totalorder %s19, 1
      %p82 = por %p80, %p81
      %p84 = scmp.ne.s32.totalorder %s67, %s83
      %p85 = scmp.eq.s32.totalorder %s19, 0
      %p86 = por %p84, %p85
      %s87 = ssub.s32 %s20, %s32
      %s88 = ssub.s32 %s21, %s28
      %s89 = sor.u32 %s87, %s88
      %p90 = scmp.eq.s32.totalorder %s89, 0
      %s92 = sadd.s32 %s91, 1
      %s93 = scalar_select %p90, %s91, %s92
      %p96 = pneg %p90
      %p97 = scmp.eq.s32.totalorder %s13, 1
      %p98 = por %p96, %p97
      %p99 = scmp.ne.s32.totalorder %s91, %s94
      %p100 = scmp.eq.s32.totalorder %s13, 0
      %p101 = por %p99, %p100
      %p102 = scmp.ne.s32.totalorder %s91, %s94
      %p103 = scmp.eq.s32.totalorder %s18, 1
      %p104 = por %p102, %p103
      %p105 = scmp.ne.s32.totalorder %s94, %s95
      %p106 = scmp.eq.s32.totalorder %s18, 0
      %p107 = por %p105, %p106
      %p108 = scmp.ne.s32.totalorder %s94, %s95
      %p109 = scmp.eq.s32.totalorder %s19, 1
      %p110 = por %p108, %p109
      %p112 = scmp.ne.s32.totalorder %s95, %s111
      %p113 = scmp.eq.s32.totalorder %s19, 0
      %p114 = por %p112, %p113
      %p115 = scmp.le.s32.totalorder 1, %s13
      %p116 = scmp.lt.s32.totalorder %s13, 3
      %p117 = pnand %p115, %p116
      %p118 = pneg %p117
      // Predicated region
      $region9: #{tpu_custom_call.1} parent=5 // pred_check
        _
      $region10: #{tpu_custom_call.1} parent=5 // pred_check_branch
        %120 = sbr.rel (%p117) target = $region12
      $region11: #{tpu_custom_call.1} parent=5 // pred_region
        %s121 = ssub.s32 %s13, 1
        // Predicated region
        $region13: #{tpu_custom_call.1} parent=11 // pred_check
          %p122 = pneg %p79
        $region14: #{tpu_custom_call.1} parent=11 // pred_check_branch
          %124 = sbr.rel (%p122) target = $region16
        $region15: #{tpu_custom_call.1} parent=11 // pred_region
          %p125 = scmp.lt.s32.totalorder %s23, 7
          %s126 = scalar_select %p125, %s23, 7
          %s127 = smul.addr %s126, 8
          %s128 = scalar_lea.vmem %s2, %s127
        $region16: #{tpu_custom_call.1} parent=11 // pred_fallthru
          _
      $region12: #{tpu_custom_call.1} parent=5 // pred_fallthru
        _
      %p129 = scmp.lt.s32.totalorder %s13, 2
      // Predicated region
      $region17: #{tpu_custom_call.1} parent=5 // pred_check
        %p130 = pneg %p129
      $region18: #{tpu_custom_call.1} parent=5 // pred_check_branch
        %132 = sbr.rel (%p130) target = $region20
      $region19: #{tpu_custom_call.1} parent=5 // pred_region
        // Predicated region
        $region21: #{tpu_custom_call.1} parent=19 // pred_check
          %p133 = pneg %p47
        $region22: #{tpu_custom_call.1} parent=19 // pred_check_branch
          %135 = sbr.rel (%p133) target = $region24
        $region23: #{tpu_custom_call.1} parent=19 // pred_region
          %p136 = scmp.lt.s32.totalorder %s20, 1
          %s137 = scalar_select %p136, %s20, 1
          %p138 = scmp.lt.s32.totalorder %s21, 0
          %s139 = scalar_select %p138, %s21, 0
          %s140 = sadd.s32 %s139, %s137
          %s141 = smul.addr %s140, 8
          %s142 = scalar_lea.vmem %s1, %s141
        $region24: #{tpu_custom_call.1} parent=19 // pred_fallthru
          _
      $region20: #{tpu_custom_call.1} parent=5 // pred_fallthru
        _
      %p143 = scmp.le.s32.totalorder 1, %s13
      %p144 = scmp.lt.s32.totalorder %s13, 3
      %p145 = pnand %p143, %p144
      %p146 = pneg %p145
      // Predicated region
      $region25: #{tpu_custom_call.1} parent=5 // pred_check
        _
      $region26: #{tpu_custom_call.1} parent=5 // pred_check_branch
        %148 = sbr.rel (%p145) target = $region28
      $region27: #{tpu_custom_call.1} parent=5 // pred_region
        %s149 = ssub.s32 %s13, 1
        %p150 = scmp.lt.s32.totalorder %s22, 1
        %s151 = scalar_select %p150, %s22, 1
        %p152 = scmp.lt.s32.totalorder %s23, 0
        %s153 = scalar_select %p152, %s23, 0
        %s154 = sadd.s32 %s153, %s151
        %s155 = smul.addr %s154, 8
        %s156 = scalar_lea.vmem %s1, %s155
        %p157 = pneg %p53
        %p158 = pneg %p50
        %p159 = scmp.lt.s32.totalorder %s23, 7
        %s160 = scalar_select %p159, %s23, 7
        %s161 = smul.addr %s160, 8
        %s162 = scalar_lea.vmem %s2, %s161
        %p163 = pneg %p79
        %p164 = pneg %p76
        %p165 = pneg %p107
        %p166 = pneg %p104
        %s167 = sand.u32 %s94, 1
        %s168 = scalar_lea.sflag [#allocation5], %s167
        %s169 = sand.u32 %s94, 1
        %s170 = smul.addr %s169, 8
        %s171 = scalar_lea.vmem [#allocation4], %s170
        %p172 = scmp.lt.s32.totalorder %s22, 1
        %s173 = scalar_select %p172, %s22, 1
        %p174 = scmp.lt.s32.totalorder %s23, 0
        %s175 = scalar_select %p174, %s23, 0
        %s176 = sadd.s32 %s175, %s173
        %s177 = smul.addr %s176, 8
        %s178 = scalar_lea.vmem %s1, %s177
        %p179 = scmp.lt.s32.totalorder %s23, 7
        %s180 = scalar_select %p179, %s23, 7
        %s181 = smul.addr %s180, 8
        %s182 = scalar_lea.vmem %s2, %s181
        %v183 = vld [vmem:[%s178] sm:$0xff]
        %v184 = vld [vmem:[%s182] sm:$0xff]
        %v185 = vadd.f32 %v183, %v184
        %vm186 = vcmask 261120
        %187 = vst.msk [vmem:[%s171] sm:$0xff] %vm186, %v185
        %s188 = sand.u32 %s94, 1
        %s189 = scalar_lea.sflag [#allocation5], %s188
        %s190 = sand.u32 %s94, 1
        %s191 = smul.addr %s190, 8
        %s192 = scalar_lea.vmem [#allocation4], %s191
        // Predicated region
        $region29: #{tpu_custom_call.1} parent=27 // pred_check
          %p193 = pneg %p104
        $region30: #{tpu_custom_call.1} parent=27 // pred_check_branch
          %195 = sbr.rel (%p193) target = $region32
        $region31: #{tpu_custom_call.1} parent=27 // pred_region
          %197 = vsyncadd %s189, 0
          %s198 = sadd.s32 %s23, %s22
          %s199 = smul.addr %s198, 8
          %s200 = scalar_lea.hbm %s3, %s199
          %s202 = sshll.u32 %s192, 4
          %s203 = int_to_ptr.vmem [resolvable:$true] %s202
          %s204 = sshll.u32 %s200, 4
          %s205 = int_to_ptr.hbm [resolvable:$true] %s204
          %207 = dma.vmem_to_hbm [thread:$0]  %s203, 128, %s205, %s189
        $region32: #{tpu_custom_call.1} parent=27 // pred_fallthru
          _
      $region28: #{tpu_custom_call.1} parent=5 // pred_fallthru
        _
      %p208 = scmp.le.s32.totalorder 2, %s13
      // Predicated region
      $region33: #{tpu_custom_call.1} parent=5 // pred_check
        %p209 = pneg %p208
      $region34: #{tpu_custom_call.1} parent=5 // pred_check_branch
        %211 = sbr.rel (%p209) target = $region36
      $region35: #{tpu_custom_call.1} parent=5 // pred_region
        %s212 = ssub.s32 %s13, 2
        // Predicated region
        $region37: #{tpu_custom_call.1} parent=35 // pred_check
          %p213 = pneg %p110
        $region38: #{tpu_custom_call.1} parent=35 // pred_check_branch
          %215 = sbr.rel (%p213) target = $region40
        $region39: #{tpu_custom_call.1} parent=35 // pred_region
          %s216 = sand.u32 %s95, 1
          %s217 = scalar_lea.sflag [#allocation5], %s216
          %s218 = sand.u32 %s95, 1
          %s219 = smul.addr %s218, 8
          %s220 = scalar_lea.vmem [#allocation4], %s219
          %222 = dma.done %s217, 128
        $region40: #{tpu_custom_call.1} parent=35 // pred_fallthru
          _
      $region36: #{tpu_custom_call.1} parent=5 // pred_fallthru
        _
    $region6: #{tpu_custom_call.1} parent=1 // loop_footer
      %s17 = sadd.s32 1, %s13
    $region7: #{tpu_custom_call.1} parent=1 // loop_footer_branch
      %12 = sbr.rel target = $region3
    $region8: #{tpu_custom_call.1} parent=1 // loop_exit
      _
    %223 = vsyncpa [#allocation5], 1
    %s224 = scalar_lea.sflag [#allocation5], 1
    %225 = vsyncpa %s224, 1

</llo_original>
